<compile_context>
chip_gen: v7x
topology: tpu7x:2x2x1
jax: 0.10.0
libtpu: 0.0.40
codegen_flags: <defaults>
</compile_context>

<pallas_src>
import jax
import jax.numpy as jnp
from jax.experimental import pallas as pl
from jax.experimental.pallas import tpu as pltpu

EPS = 1e-10


def _round_up(x, m):
    return (x + m - 1) // m * m


# ---------------------------------------------------------------------------
# tiling heuristics
# ---------------------------------------------------------------------------

def _choose_row_tiling(m):
    """Returns (Mp, tm): rows padded to Mp, row block tm with Mp % tm == 0.

    Aims for >= 2 row blocks whenever the row count allows it so both v7x
    TensorCores get work on the 'parallel' grid axis (no effect on v5e/v6e).
    A single block equal to the full row dim is always layout-legal, so small
    batches need no row padding at all."""
    if m >= 256 and m % 128 == 0:
        return m, 128
    if 16 <= m <= 2048 and m % 16 == 0:
        return m, m // 2                      # exactly 2 row blocks
    if m <= 1024:
        return m, m                           # single block == full dim
    mp = _round_up(m, 128)                    # fallback: pad rows (extra pass)
    return mp, 128


def _choose_feature_tiling(f):
    """Returns (Fp, tk): feature dim padded to a multiple of 128, k-tile tk."""
    fp = _round_up(f, 128)
    if fp <= 4096:
        return fp, fp                         # whole reduction in one step
    for cand in (4096, 2048, 1024, 512, 256, 128):
        if fp % cand == 0:
            return fp, cand
    return fp, 128                            # unreachable: fp % 128 == 0


def _choose_loss_tiling(half):
    """Returns (Hp, tr, n_r) for the (half, Kp) loss pass."""
    if half <= 1024:
        return half, half, 1
    hp = _round_up(half, 512)
    return hp, 512, hp // 512


# ---------------------------------------------------------------------------
# kernel 1:  out = x @ W + b   (bf16 MXU feed, f32 accumulation into o_ref)
# ---------------------------------------------------------------------------

def _make_linear_kernel(tk, w_resident):
    def kernel(x_ref, w_ref, b_ref, o_ref):
        k = pl.program_id(1)

        @pl.when(k == 0)
        def _():
            o_ref[...] = jnp.zeros_like(o_ref)

        if w_resident:
            # Whole bf16 weight lives in VMEM (constant block index -> loaded
            # once); slice the current reduction chunk out of it.
            off = pl.multiple_of(k * tk, tk)
            w_tile = w_ref[pl.ds(off, tk), :]
        else:
            w_tile = w_ref[...]

        o_ref[...] += jnp.dot(x_ref[...], w_tile,
                              preferred_element_type=jnp.float32)

        @pl.when(k == pl.num_programs(1) - 1)
        def _():
            o_ref[...] += b_ref[...]

    return kernel


# ---------------------------------------------------------------------------
# kernel 2: permuted + mixed soft labels, mixed model outputs -> scalar loss
# ---------------------------------------------------------------------------

def _make_mix_loss_kernel(half, num_classes, tr):
    inv_half = 1.0 / half

    def kernel(lam_ref, t1_ref, o1_ref, t2_ref, o2_ref, m1_ref, m2_ref, loss_ref):
        r = pl.program_id(0)

        @pl.when(r == 0)
        def _():
            loss_ref[0, 0] = jnp.float32(0.0)

        lam = lam_ref[0, 0]

        def soft_label(t, o):
            pos = (t == 1.0).astype(jnp.float32)
            unl = jnp.logical_or(t == 0.0, t == -1.0).astype(jnp.float32)
            # exp(log(sigmoid(o) + eps)) == sigmoid(o) + eps  (identity removed)
            return pos + (jax.nn.sigmoid(o) + EPS) * unl

        output_mix = (soft_label(t1_ref[...], o1_ref[...]) * lam
                      + soft_label(t2_ref[...], o2_ref[...]) * (1.0 - lam))

        # model is Linear =>  model(lam*x1p + (1-lam)*x2)
        #                   == lam*model(x1p) + (1-lam)*model(x2)   (bias folds in)
        out_all = m1_ref[...] * lam + m2_ref[...] * (1.0 - lam)
        out_all_log = jnp.log(jax.nn.sigmoid(out_all) + EPS)

        diff = jnp.log(output_mix + EPS) - out_all_log

        rows_p, cols_p = out_all.shape
        rows = jax.lax.broadcasted_iota(jnp.int32, (rows_p, cols_p), 0) + r * tr
        cols = jax.lax.broadcasted_iota(jnp.int32, (rows_p, cols_p), 1)
        mask = jnp.logical_and(rows < half, cols < num_classes).astype(jnp.float32)

        loss_ref[0, 0] += jnp.sum(diff * diff * mask) * inv_half

    return kernel


# ---------------------------------------------------------------------------
# wrapper
# ---------------------------------------------------------------------------

def mixup_loss(data, target, output, w, b, *, mix_alpha, key):
    # TODO(synk): the generic nn `model` argument has no Pallas equivalent; it
    # is realized as a synthetic Linear(F -> K), and that linearity is exactly
    # what makes the post-matmul permutation / lam-mix below exact.
    B, C, H, W = data.shape
    F = C * H * W
    K = target.shape[1]

    half = B // 2                    # int(B / 2)   (same split as the reference)
    half_hi = (B + 1) // 2           # math.ceil(B / 2)
    if half < 1:
        raise ValueError("mixup needs batch >= 2 (reference divides by floor(B/2)).")

    Kp = _round_up(K, 128)
    Mp, tm = _choose_row_tiling(B)
    Fp, tk = _choose_feature_tiling(F)
    n_m, n_k = Mp // tm, Fp // tk

    # bf16 HBM feed for the big operand; reshape + cast (+ pad only when the
    # shapes are not already tile-friendly) fuse into one producing op in XLA.
    x = data.reshape(B, F).astype(jnp.bfloat16)
    if Mp != B or Fp != F:
        x = jnp.pad(x, ((0, Mp - B), (0, Fp - F)))
    w_p = jnp.pad(w.astype(jnp.bfloat16), ((0, Fp - F), (0, Kp - K)))
    b_p = jnp.pad(b.reshape(1, K).astype(jnp.float32), ((0, 0), (0, Kp - K)))

    # Keep the whole bf16 weight VMEM-resident (DMA'd once) when small enough;
    # otherwise stream (tk, Kp) tiles per reduction step.
    w_resident = (Fp * Kp * 2) <= (4 << 20)
    if w_resident:
        w_spec = pl.BlockSpec((Fp, Kp), lambda i, k: (0, 0))
    else:
        w_spec = pl.BlockSpec((tk, Kp), lambda i, k: (k, 0))

    out_full = pl.pallas_call(
        _make_linear_kernel(tk, w_resident),
        out_shape=jax.ShapeDtypeStruct((Mp, Kp), jnp.float32),
        grid=(n_m, n_k),
        in_specs=[
            pl.BlockSpec((tm, tk), lambda i, k: (i, k)),   # data tile (bf16)
            w_spec,                                        # weight (bf16)
            pl.BlockSpec((1, Kp), lambda i, k: (0, 0)),    # bias
        ],
        out_specs=pl.BlockSpec((tm, Kp), lambda i, k: (i, 0)),
        compiler_params=pltpu.CompilerParams(
            dimension_semantics=("parallel", "arbitrary"),
            vmem_limit_bytes=24 * 1024 * 1024,
        ),
    )(x, w_p, b_p)

    # ---- tiny (half, K)/(half, Kp) post-processing: the row permutation and
    # the lam-mix act on the matmul OUTPUTS (exact for a linear model), so the
    # big (half, F) tensors are never gathered, mixed, or re-read. ----
    out1 = out_full[:half]
    out2 = out_full[half_hi:half_hi + half]
    t1 = target[:half].astype(jnp.float32)
    o1 = output[:half].astype(jnp.float32)
    t2 = target[half_hi:half_hi + half].astype(jnp.float32)
    o2 = output[half_hi:half_hi + half].astype(jnp.float32)

    kperm, kbeta = jax.random.split(key)
    perm = jax.random.permutation(kperm, half)             # torch.randperm
    lam = jax.random.beta(kbeta, mix_alpha, mix_alpha)     # Beta(alpha, alpha)
    lam = lam.astype(jnp.float32).reshape(1, 1)

    t1p, o1p, m1p = t1[perm], o1[perm], out1[perm]         # tiny gathers only

    Hp, tr, n_r = _choose_loss_tiling(half)

    def pad2(a, rows, cols):
        return jnp.pad(a, ((0, rows - a.shape[0]), (0, cols - a.shape[1])))

    t1p, o1p = pad2(t1p, Hp, Kp), pad2(o1p, Hp, Kp)
    t2p, o2p = pad2(t2, Hp, Kp), pad2(o2, Hp, Kp)
    m1p, m2p = pad2(m1p, Hp, Kp), pad2(out2, Hp, Kp)

    smem = pl.BlockSpec(memory_space=pltpu.MemorySpace.SMEM)
    row_spec = pl.BlockSpec((tr, Kp), lambda r: (r, 0))

    reg_loss = pl.pallas_call(
        _make_mix_loss_kernel(half, K, tr),
        out_shape=jax.ShapeDtypeStruct((1, 1), jnp.float32),
        grid=(n_r,),
        in_specs=[smem, row_spec, row_spec, row_spec, row_spec, row_spec, row_spec],
        out_specs=smem,
        compiler_params=pltpu.CompilerParams(
            dimension_semantics=("arbitrary",),
            vmem_limit_bytes=24 * 1024 * 1024,
        ),
    )(lam, t1p, o1p, t2p, o2p, m1p, m2p)

    return reg_loss[0, 0]


if __name__ == "__main__":
    key = jax.random.PRNGKey(0)
    kd, kt, ko, kw, kr = jax.random.split(key, 5)

    B, C, H, W, K = 4, 4, 16, 16, 8
    F = C * H * W

    data = jax.random.normal(kd, (B, C, H, W), dtype=jnp.float32)
    # PU-learning style targets in {-1, 0, 1}
    target = jax.random.randint(kt, (B, K), -1, 2).astype(jnp.float32)
    output = jax.random.normal(ko, (B, K), dtype=jnp.float32)

    # deterministic synthetic "model" parameters: Linear(F -> K)
    w = jax.random.normal(kw, (F, K), dtype=jnp.float32) * 0.02
    b = jnp.zeros((1, K), dtype=jnp.float32)

    loss = mixup_loss(data, target, output, w, b, mix_alpha=0.3, key=kr)
    jax.block_until_ready(loss)
    print("KERNEL_OK")
</pallas_src>

<mosaic_0001>
module attributes {stable_mosaic.version = 11 : i64} {
  func.func @kernel(%arg0: i32, %arg1: i32, %arg2: memref<4x1024xbf16, #tpu.memory_space<vmem>>, %arg3: memref<1024x128xbf16, #tpu.memory_space<vmem>>, %arg4: memref<1x128xf32, #tpu.memory_space<vmem>>, %arg5: memref<4x128xf32, #tpu.memory_space<vmem>>) attributes {dimension_semantics = [#tpu.dimension_semantics<parallel>, #tpu.dimension_semantics<arbitrary>], iteration_bounds = array<i64: 1, 1>, scalar_prefetch = 0 : i64, scratch_operands = 0 : i64, tpu.core_type = #tpu.core_type<tc>, window_params = [{transform_indices = @transform_0, window_bounds = array<i64: 4, 1024>}, {pipeline_mode = #tpu.pipeline_mode<synchronous>, transform_indices = @transform_1, window_bounds = array<i64: 1024, 128>}, {pipeline_mode = #tpu.pipeline_mode<synchronous>, transform_indices = @transform_2, window_bounds = array<i64: 1, 128>}, {transform_indices = @transform_3, window_bounds = array<i64: 4, 128>}]} {
    %c0_i32 = arith.constant 0 : i32
    %0 = arith.cmpi eq, %arg1, %c0_i32 : i32
    %1 = arith.extui %0 : i1 to i32
    %c0_i32_0 = arith.constant 0 : i32
    %2 = arith.cmpi ne, %1, %c0_i32_0 : i32
    scf.if %2 {
      %cst_9 = arith.constant 0.000000e+00 : f32
      %15 = vector.broadcast %cst_9 : f32 to vector<4x128xf32>
      %c0_10 = arith.constant 0 : index
      %c0_11 = arith.constant 0 : index
      %16 = vector.load %arg5[%c0_10, %c0_11] : memref<4x128xf32, #tpu.memory_space<vmem>>, vector<4x128xf32>
      tpu.vector_store %arg5[%c0_10, %c0_11], %15 {strides = array<i32>} : memref<4x128xf32, #tpu.memory_space<vmem>>, vector<4x128xf32>,
    } else {
    }
    %c1024_i32 = arith.constant 1024 : i32
    %3 = arith.muli %arg1, %c1024_i32 : i32
    %4 = tpu.assume_multiple %3, 1024 : i32
    %5 = arith.index_cast %4 : i32 to index
    %c0 = arith.constant 0 : index
    %6 = vector.load %arg3[%5, %c0] : memref<1024x128xbf16, #tpu.memory_space<vmem>>, vector<1024x128xbf16>
    %c0_1 = arith.constant 0 : index
    %c0_2 = arith.constant 0 : index
    %7 = vector.load %arg5[%c0_1, %c0_2] : memref<4x128xf32, #tpu.memory_space<vmem>>, vector<4x128xf32>
    %c0_3 = arith.constant 0 : index
    %c0_4 = arith.constant 0 : index
    %8 = vector.load %arg2[%c0_3, %c0_4] : memref<4x1024xbf16, #tpu.memory_space<vmem>>, vector<4x1024xbf16>
    %cst = arith.constant dense<0.000000e+00> : vector<4x128xf32>
    %9 = tpu.matmul %8, %6, %cst {dimension_numbers = #tpu.dot_dimension_numbers<[1], [0], [0], [1], [0, 0, 1, 1], [], []>} : vector<4x1024xbf16>, vector<1024x128xbf16>, vector<4x128xf32> -> vector<4x128xf32>
    %10 = arith.addf %7, %9 : vector<4x128xf32>
    %c0_5 = arith.constant 0 : index
    %c0_6 = arith.constant 0 : index
    %11 = vector.load %arg5[%c0_5, %c0_6] : memref<4x128xf32, #tpu.memory_space<vmem>>, vector<4x128xf32>
    tpu.vector_store %arg5[%c0_5, %c0_6], %10 {strides = array<i32>} : memref<4x128xf32, #tpu.memory_space<vmem>>, vector<4x128xf32>,
    %c0_i32_7 = arith.constant 0 : i32
    %12 = arith.cmpi eq, %arg1, %c0_i32_7 : i32
    %13 = arith.extui %12 : i1 to i32
    %c0_i32_8 = arith.constant 0 : i32
    %14 = arith.cmpi ne, %13, %c0_i32_8 : i32
    scf.if %14 {
      %c0_9 = arith.constant 0 : index
      %c0_10 = arith.constant 0 : index
      %15 = vector.load %arg5[%c0_9, %c0_10] : memref<4x128xf32, #tpu.memory_space<vmem>>, vector<4x128xf32>
      %c0_11 = arith.constant 0 : index
      %c0_12 = arith.constant 0 : index
      %16 = vector.load %arg4[%c0_11, %c0_12] : memref<1x128xf32, #tpu.memory_space<vmem>>, vector<1x128xf32>
      %17 = vector.broadcast %16 : vector<1x128xf32> to vector<4x128xf32>
      %18 = arith.addf %15, %17 : vector<4x128xf32>
      %c0_13 = arith.constant 0 : index
      %c0_14 = arith.constant 0 : index
      %19 = vector.load %arg5[%c0_13, %c0_14] : memref<4x128xf32, #tpu.memory_space<vmem>>, vector<4x128xf32>
      tpu.vector_store %arg5[%c0_13, %c0_14], %18 {strides = array<i32>} : memref<4x128xf32, #tpu.memory_space<vmem>>, vector<4x128xf32>,
    } else {
    }
    return
  }
  func.func @transform_0(%arg0: i32, %arg1: i32) -> (i32, i32) {
    %c0_i32 = arith.constant 0 : i32
    return %arg0, %arg1 : i32, i32
  }
  func.func @transform_1(%arg0: i32, %arg1: i32) -> (i32, i32) {
    %c0_i32 = arith.constant 0 : i32
    %c0_i32_0 = arith.constant 0 : i32
    %c0_i32_1 = arith.constant 0 : i32
    return %c0_i32, %c0_i32_0 : i32, i32
  }
  func.func @transform_2(%arg0: i32, %arg1: i32) -> (i32, i32) {
    %c0_i32 = arith.constant 0 : i32
    %c0_i32_0 = arith.constant 0 : i32
    %c0_i32_1 = arith.constant 0 : i32
    return %c0_i32, %c0_i32_0 : i32, i32
  }
  func.func @transform_3(%arg0: i32, %arg1: i32) -> (i32, i32) {
    %c0_i32 = arith.constant 0 : i32
    %c0_i32_0 = arith.constant 0 : i32
    return %arg0, %c0_i32 : i32, i32
  }
}

</mosaic_0001>

<llo_original>
// kernel: tpu_custom_call.1
$region0: #{tpu_custom_call.1}
  #allocation0 [shape = 'u32[]', space=smem, size = 0x4, offset = 0x4, fixed_abs, tag = 'smem constant byte address 0x4 - core index']
  #allocation1 [shape = 'u32[144,128]{1,0:T(1,128)}', space=vmem, size = 0x12000, scoped, tag = 'internal scratch']
  %s0 = inlined_call_operand.hbm [shape: bf16[4,1024], index: 0, kind: input, shape index: {}]
  %s1 = inlined_call_operand.hbm [shape: bf16[1024,128], index: 1, kind: input, shape index: {}]
  %s2 = inlined_call_operand.vmem [shape: f32[1,128], index: 2, kind: input, shape index: {}]
  %s3 = inlined_call_operand.hbm [shape: f32[4,128], index: 3, kind: output, shape index: {}]
  %s4 = sld [smem:[#allocation0]]
  $region38: #{tpu_custom_call.1} parent=0
    _
  %s6 = ssub.s32 1, %s4
  %s7 = scalar_select 0, %s6, %s4
  $region1: #{tpu_custom_call.1} parent=0
    #allocation2 [shape = 'u8[8192]{0}', space=vmem, size = 0x2000, scoped, tag = 'input window, operand 0, single buffered']
    #allocation3 [shape = 's32[1]{0}', space=sflag, size = 0x4, scoped, tag = 'scoped memory for tpu_custom_call.1']
    #allocation4 [shape = 's32[1]{0}', space=sflag, size = 0x4, scoped, tag = 'scoped memory for tpu_custom_call.1']
    #allocation5 [shape = 'u8[262144]{0}', space=vmem, size = 0x40000, scoped, tag = 'input window, operand 1, single buffered']
    #allocation6 [shape = 's32[1]{0}', space=sflag, size = 0x4, scoped, tag = 'scoped memory for tpu_custom_call.1']
    #allocation7 [shape = 'u8[2048]{0}', space=vmem, size = 0x800, scoped, tag = 'output window, operand 0, single buffered']
    %8 = vsyncpa [#allocation3], 0
    %9 = vsyncpa [#allocation6], 0
    %10 = vsyncpa [#allocation4], 0
    // Predicated region
    $region2: #{tpu_custom_call.1} parent=1 // pred_check
      _
    $region3: #{tpu_custom_call.1} parent=1 // pred_check_branch
      %12 = sbr.rel (0) target = $region5
    $region4: #{tpu_custom_call.1} parent=1 // pred_region
      %s14 = ssub.s32 256, 256
      %15 = vsyncadd [#allocation3], %s14
      %s17 = sshll.u32 [#allocation2], 4
      %s18 = int_to_ptr.vmem [resolvable:$true] %s17
      %20 = dma.hbm_to_vmem [thread:$0]  %s0, 256, %s18, [#allocation3]
    $region5: #{tpu_custom_call.1} parent=1 // pred_fallthru
      _
    // Predicated region
    $region6: #{tpu_custom_call.1} parent=1 // pred_check
      _
    $region7: #{tpu_custom_call.1} parent=1 // pred_check_branch
      %22 = sbr.rel (0) target = $region9
    $region8: #{tpu_custom_call.1} parent=1 // pred_region
      %s24 = ssub.s32 8192, 8192
      %25 = vsyncadd [#allocation6], %s24
      %s26 = sshll.u32 [#allocation5], 4
      %s27 = int_to_ptr.vmem [resolvable:$true] %s26
      %32 = dma.hbm_to_vmem [thread:$0]  %s1, 8192, %s27, [#allocation6], 64, 64, 4
    $region9: #{tpu_custom_call.1} parent=1 // pred_fallthru
      _
    // Predicated region
    $region10: #{tpu_custom_call.1} parent=1 // pred_check
      _
    $region11: #{tpu_custom_call.1} parent=1 // pred_check_branch
      %34 = sbr.rel (0) target = $region13
    $region12: #{tpu_custom_call.1} parent=1 // pred_region
      _
    $region13: #{tpu_custom_call.1} parent=1 // pred_fallthru
      _
    // Predicated region
    $region14: #{tpu_custom_call.1} parent=1 // pred_check
      _
    $region15: #{tpu_custom_call.1} parent=1 // pred_check_branch
      %36 = sbr.rel (0) target = $region17
    $region16: #{tpu_custom_call.1} parent=1 // pred_region
      %37 = dma.done [#allocation3], 256
    $region17: #{tpu_custom_call.1} parent=1 // pred_fallthru
      _
    // Predicated region
    $region18: #{tpu_custom_call.1} parent=1 // pred_check
      _
    $region19: #{tpu_custom_call.1} parent=1 // pred_check_branch
      %39 = sbr.rel (0) target = $region21
    $region20: #{tpu_custom_call.1} parent=1 // pred_region
      %40 = dma.done [#allocation6], 8192
    $region21: #{tpu_custom_call.1} parent=1 // pred_fallthru
      _
    %p42 = scmp.eq.s32.totalorder 0, 0
    // Predicated region
    $region22: #{tpu_custom_call.1} parent=1 // pred_check
      %p43 = pneg %p42
    $region23: #{tpu_custom_call.1} parent=1 // pred_check_branch
      %45 = sbr.rel (%p43) target = $region25
    $region24: #{tpu_custom_call.1} parent=1 // pred_region
      %46 = vst [vmem:[#allocation7] sm:$0xf] 0.0
    $region25: #{tpu_custom_call.1} parent=1 // pred_fallthru
      _
    %s47 = smul.u32 0, 1024
    %s48 = sshra.s32 %s47, 3
    %s49 = sand.u32 %s47, 7
    %s50 = smul.addr %s48, 4
    %s51 = scalar_lea.vmem [#allocation5], %s50
    %v52 = vld [vmem:[%s51] sm:$0xf]
    %v53 = vld [vmem:[%s51 + $0x4] sm:$0xf]
    %v54 = vld [vmem:[%s51 + $0x8] sm:$0xf]
    %v55 = vld [vmem:[%s51 + $0xc] sm:$0xf]
    %v56 = vld [vmem:[%s51 + $0x10] sm:$0xf]
    %v57 = vld [vmem:[%s51 + $0x14] sm:$0xf]
    %v58 = vld [vmem:[%s51 + $0x18] sm:$0xf]
    %v59 = vld [vmem:[%s51 + $0x1c] sm:$0xf]
    %v60 = vld [vmem:[%s51 + $0x20] sm:$0xf]
    %v61 = vld [vmem:[%s51 + $0x24] sm:$0xf]
    %v62 = vld [vmem:[%s51 + $0x28] sm:$0xf]
    %v63 = vld [vmem:[%s51 + $0x2c] sm:$0xf]
    %v64 = vld [vmem:[%s51 + $0x30] sm:$0xf]
    %v65 = vld [vmem:[%s51 + $0x34] sm:$0xf]
    %v66 = vld [vmem:[%s51 + $0x38] sm:$0xf]
    %v67 = vld [vmem:[%s51 + $0x3c] sm:$0xf]
    %v68 = vld [vmem:[%s51 + $0x40] sm:$0xf]
    %v69 = vld [vmem:[%s51 + $0x44] sm:$0xf]
    %v70 = vld [vmem:[%s51 + $0x48] sm:$0xf]
    %v71 = vld [vmem:[%s51 + $0x4c] sm:$0xf]
    %v72 = vld [vmem:[%s51 + $0x50] sm:$0xf]
    %v73 = vld [vmem:[%s51 + $0x54] sm:$0xf]
    %v74 = vld [vmem:[%s51 + $0x58] sm:$0xf]
    %v75 = vld [vmem:[%s51 + $0x5c] sm:$0xf]
    %v76 = vld [vmem:[%s51 + $0x60] sm:$0xf]
    %v77 = vld [vmem:[%s51 + $0x64] sm:$0xf]
    %v78 = vld [vmem:[%s51 + $0x68] sm:$0xf]
    %v79 = vld [vmem:[%s51 + $0x6c] sm:$0xf]
    %v80 = vld [vmem:[%s51 + $0x70] sm:$0xf]
    %v81 = vld [vmem:[%s51 + $0x74] sm:$0xf]
    %v82 = vld [vmem:[%s51 + $0x78] sm:$0xf]
    %v83 = vld [vmem:[%s51 + $0x7c] sm:$0xf]
    %v84 = vld [vmem:[%s51 + $0x80] sm:$0xf]
    %v85 = vld [vmem:[%s51 + $0x84] sm:$0xf]
    %v86 = vld [vmem:[%s51 + $0x88] sm:$0xf]
    %v87 = vld [vmem:[%s51 + $0x8c] sm:$0xf]
    %v88 = vld [vmem:[%s51 + $0x90] sm:$0xf]
    %v89 = vld [vmem:[%s51 + $0x94] sm:$0xf]
    %v90 = vld [vmem:[%s51 + $0x98] sm:$0xf]
    %v91 = vld [vmem:[%s51 + $0x9c] sm:$0xf]
    %v92 = vld [vmem:[%s51 + $0xa0] sm:$0xf]
    %v93 = vld [vmem:[%s51 + $0xa4] sm:$0xf]
    %v94 = vld [vmem:[%s51 + $0xa8] sm:$0xf]
    %v95 = vld [vmem:[%s51 + $0xac] sm:$0xf]
    %v96 = vld [vmem:[%s51 + $0xb0] sm:$0xf]
    %v97 = vld [vmem:[%s51 + $0xb4] sm:$0xf]
    %v98 = vld [vmem:[%s51 + $0xb8] sm:$0xf]
    %v99 = vld [vmem:[%s51 + $0xbc] sm:$0xf]
    %v100 = vld [vmem:[%s51 + $0xc0] sm:$0xf]
    %v101 = vld [vmem:[%s51 + $0xc4] sm:$0xf]
    %v102 = vld [vmem:[%s51 + $0xc8] sm:$0xf]
    %v103 = vld [vmem:[%s51 + $0xcc] sm:$0xf]
    %v104 = vld [vmem:[%s51 + $0xd0] sm:$0xf]
    %v105 = vld [vmem:[%s51 + $0xd4] sm:$0xf]
    %v106 = vld [vmem:[%s51 + $0xd8] sm:$0xf]
    %v107 = vld [vmem:[%s51 + $0xdc] sm:$0xf]
    %v108 = vld [vmem:[%s51 + $0xe0] sm:$0xf]
    %v109 = vld [vmem:[%s51 + $0xe4] sm:$0xf]
    %v110 = vld [vmem:[%s51 + $0xe8] sm:$0xf]
    %v111 = vld [vmem:[%s51 + $0xec] sm:$0xf]
    %v112 = vld [vmem:[%s51 + $0xf0] sm:$0xf]
    %v113 = vld [vmem:[%s51 + $0xf4] sm:$0xf]
    %v114 = vld [vmem:[%s51 + $0xf8] sm:$0xf]
    %v115 = vld [vmem:[%s51 + $0xfc] sm:$0xf]
    %v116 = vld [vmem:[%s51 + $0x100] sm:$0xf]
    %v117 = vld [vmem:[%s51 + $0x104] sm:$0xf]
    %v118 = vld [vmem:[%s51 + $0x108] sm:$0xf]
    %v119 = vld [vmem:[%s51 + $0x10c] sm:$0xf]
    %v120 = vld [vmem:[%s51 + $0x110] sm:$0xf]
    %v121 = vld [vmem:[%s51 + $0x114] sm:$0xf]
    %v122 = vld [vmem:[%s51 + $0x118] sm:$0xf]
    %v123 = vld [vmem:[%s51 + $0x11c] sm:$0xf]
    %v124 = vld [vmem:[%s51 + $0x120] sm:$0xf]
    %v125 = vld [vmem:[%s51 + $0x124] sm:$0xf]
    %v126 = vld [vmem:[%s51 + $0x128] sm:$0xf]
    %v127 = vld [vmem:[%s51 + $0x12c] sm:$0xf]
    %v128 = vld [vmem:[%s51 + $0x130] sm:$0xf]
    %v129 = vld [vmem:[%s51 + $0x134] sm:$0xf]
    %v130 = vld [vmem:[%s51 + $0x138] sm:$0xf]
    %v131 = vld [vmem:[%s51 + $0x13c] sm:$0xf]
    %v132 = vld [vmem:[%s51 + $0x140] sm:$0xf]
    %v133 = vld [vmem:[%s51 + $0x144] sm:$0xf]
    %v134 = vld [vmem:[%s51 + $0x148] sm:$0xf]
    %v135 = vld [vmem:[%s51 + $0x14c] sm:$0xf]
    %v136 = vld [vmem:[%s51 + $0x150] sm:$0xf]
    %v137 = vld [vmem:[%s51 + $0x154] sm:$0xf]
    %v138 = vld [vmem:[%s51 + $0x158] sm:$0xf]
    %v139 = vld [vmem:[%s51 + $0x15c] sm:$0xf]
    %v140 = vld [vmem:[%s51 + $0x160] sm:$0xf]
    %v141 = vld [vmem:[%s51 + $0x164] sm:$0xf]
    %v142 = vld [vmem:[%s51 + $0x168] sm:$0xf]
    %v143 = vld [vmem:[%s51 + $0x16c] sm:$0xf]
    %v144 = vld [vmem:[%s51 + $0x170] sm:$0xf]
    %v145 = vld [vmem:[%s51 + $0x174] sm:$0xf]
    %v146 = vld [vmem:[%s51 + $0x178] sm:$0xf]
    %v147 = vld [vmem:[%s51 + $0x17c] sm:$0xf]
    %v148 = vld [vmem:[%s51 + $0x180] sm:$0xf]
    %v149 = vld [vmem:[%s51 + $0x184] sm:$0xf]
    %v150 = vld [vmem:[%s51 + $0x188] sm:$0xf]
    %v151 = vld [vmem:[%s51 + $0x18c] sm:$0xf]
    %v152 = vld [vmem:[%s51 + $0x190] sm:$0xf]
    %v153 = vld [vmem:[%s51 + $0x194] sm:$0xf]
    %v154 = vld [vmem:[%s51 + $0x198] sm:$0xf]
    %v155 = vld [vmem:[%s51 + $0x19c] sm:$0xf]
    %v156 = vld [vmem:[%s51 + $0x1a0] sm:$0xf]
    %v157 = vld [vmem:[%s51 + $0x1a4] sm:$0xf]
    %v158 = vld [vmem:[%s51 + $0x1a8] sm:$0xf]
    %v159 = vld [vmem:[%s51 + $0x1ac] sm:$0xf]
    %v160 = vld [vmem:[%s51 + $0x1b0] sm:$0xf]
    %v161 = vld [vmem:[%s51 + $0x1b4] sm:$0xf]
    %v162 = vld [vmem:[%s51 + $0x1b8] sm:$0xf]
    %v163 = vld [vmem:[%s51 + $0x1bc] sm:$0xf]
    %v164 = vld [vmem:[%s51 + $0x1c0] sm:$0xf]
    %v165 = vld [vmem:[%s51 + $0x1c4] sm:$0xf]
    %v166 = vld [vmem:[%s51 + $0x1c8] sm:$0xf]
    %v167 = vld [vmem:[%s51 + $0x1cc] sm:$0xf]
    %v168 = vld [vmem:[%s51 + $0x1d0] sm:$0xf]
    %v169 = vld [vmem:[%s51 + $0x1d4] sm:$0xf]
    %v170 = vld [vmem:[%s51 + $0x1d8] sm:$0xf]
    %v171 = vld [vmem:[%s51 + $0x1dc] sm:$0xf]
    %v172 = vld [vmem:[%s51 + $0x1e0] sm:$0xf]
    %v173 = vld [vmem:[%s51 + $0x1e4] sm:$0xf]
    %v174 = vld [vmem:[%s51 + $0x1e8] sm:$0xf]
    %v175 = vld [vmem:[%s51 + $0x1ec] sm:$0xf]
    %v176 = vld [vmem:[%s51 + $0x1f0] sm:$0xf]
    %v177 = vld [vmem:[%s51 + $0x1f4] sm:$0xf]
    %v178 = vld [vmem:[%s51 + $0x1f8] sm:$0xf]
    %v179 = vld [vmem:[%s51 + $0x1fc] sm:$0xf]
    %v180 = vld [vmem:[#allocation7] sm:$0xf]
    %v181 = vld [vmem:[#allocation2] sm:$0xff]
    %v182 = vld [vmem:[#allocation2 + $0x8] sm:$0xff]
    %v185 = vcombine.high %v181, %v181
    %v187 = vunpack.c.l.s4 1983009808
    %v188 = vunpack.c.0.s8 %v187
    %v189 = vlaneseq
    %v190 = vshrl.u32 %v189, 7
    %v191 = vsub.s32 %v188, %v190
    %v192 = vrot.slane %v181, %v191
    %v194 = vunpack.c.l.s4 1983009808
    %v195 = vunpack.c.0.s8 %v194
    %v196 = vlaneseq
    %v197 = vshrl.u32 %v196, 7
    %v198 = vsub.s32 %v195, %v197
    %v199 = vrot.slane %v185, %v198
    %v200 = vcombine.high %v192, %v192
    %v201 = vcombine.high %v199, %v199
    %v202 = vcombine.high %v182, %v182
    %v204 = vunpack.c.l.s4 1983009808
    %v205 = vunpack.c.0.s8 %v204
    %v206 = vlaneseq
    %v207 = vshrl.u32 %v206, 7
    %v208 = vsub.s32 %v205, %v207
    %v209 = vrot.slane %v182, %v208
    %v211 = vunpack.c.l.s4 1983009808
    %v212 = vunpack.c.0.s8 %v211
    %v213 = vlaneseq
    %v214 = vshrl.u32 %v213, 7
    %v215 = vsub.s32 %v212, %v214
    %v216 = vrot.slane %v202, %v215
    %v217 = vcombine.high %v209, %v209
    %v218 = vcombine.high %v216, %v216
    %v355 = vunpack.c.l.b16 %v52
    %v356 = vunpack.c.l.b16 %v53
    %v357 = vunpack.c.l.b16 %v54
    %v358 = vunpack.c.l.b16 %v55
    %v359 = vunpack.c.l.b16 %v56
    %v360 = vunpack.c.l.b16 %v57
    %v361 = vunpack.c.l.b16 %v58
    %v362 = vunpack.c.l.b16 %v59
    %v363 = vunpack.c.l.b16 %v60
    %v364 = vunpack.c.l.b16 %v61
    %v365 = vunpack.c.l.b16 %v62
    %v366 = vunpack.c.l.b16 %v63
    %v367 = vunpack.c.l.b16 %v64
    %v368 = vunpack.c.l.b16 %v65
    %v369 = vunpack.c.l.b16 %v66
    %v370 = vunpack.c.l.b16 %v67
    %v371 = vunpack.c.l.b16 %v68
    %v372 = vunpack.c.l.b16 %v69
    %v373 = vunpack.c.l.b16 %v70
    %v374 = vunpack.c.l.b16 %v71
    %v375 = vunpack.c.l.b16 %v72
    %v376 = vunpack.c.l.b16 %v73
    %v377 = vunpack.c.l.b16 %v74
    %v378 = vunpack.c.l.b16 %v75
    %v379 = vunpack.c.l.b16 %v76
    %v380 = vunpack.c.l.b16 %v77
    %v381 = vunpack.c.l.b16 %v78
    %v382 = vunpack.c.l.b16 %v79
    %v383 = vunpack.c.l.b16 %v80
    %v384 = vunpack.c.l.b16 %v81
    %v385 = vunpack.c.l.b16 %v82
    %v386 = vunpack.c.l.b16 %v83
    %v387 = vunpack.c.l.b16 %v84
    %v388 = vunpack.c.l.b16 %v85
    %v389 = vunpack.c.l.b16 %v86
    %v390 = vunpack.c.l.b16 %v87
    %v391 = vunpack.c.l.b16 %v88
    %v392 = vunpack.c.l.b16 %v89
    %v393 = vunpack.c.l.b16 %v90
    %v394 = vunpack.c.l.b16 %v91
    %v395 = vunpack.c.l.b16 %v92
    %v396 = vunpack.c.l.b16 %v93
    %v397 = vunpack.c.l.b16 %v94
    %v398 = vunpack.c.l.b16 %v95
    %v399 = vunpack.c.l.b16 %v96
    %v400 = vunpack.c.l.b16 %v97
    %v401 = vunpack.c.l.b16 %v98
    %v402 = vunpack.c.l.b16 %v99
    %v403 = vunpack.c.l.b16 %v100
    %v404 = vunpack.c.l.b16 %v101
    %v405 = vunpack.c.l.b16 %v102
    %v406 = vunpack.c.l.b16 %v103
    %v407 = vunpack.c.l.b16 %v104
    %v408 = vunpack.c.l.b16 %v105
    %v409 = vunpack.c.l.b16 %v106
    %v410 = vunpack.c.l.b16 %v107
    %v411 = vunpack.c.l.b16 %v108
    %v412 = vunpack.c.l.b16 %v109
    %v413 = vunpack.c.l.b16 %v110
    %v414 = vunpack.c.l.b16 %v111
    %v415 = vunpack.c.l.b16 %v112
    %v416 = vunpack.c.l.b16 %v113
    %v417 = vunpack.c.l.b16 %v114
    %v418 = vunpack.c.l.b16 %v115
    %v419 = vunpack.c.l.b16 %v116
    %v420 = vunpack.c.l.b16 %v117
    %v421 = vunpack.c.l.b16 %v118
    %v422 = vunpack.c.l.b16 %v119
    %v423 = vunpack.c.l.b16 %v120
    %v424 = vunpack.c.l.b16 %v121
    %v425 = vunpack.c.l.b16 %v122
    %v426 = vunpack.c.l.b16 %v123
    %v427 = vunpack.c.l.b16 %v124
    %v428 = vunpack.c.l.b16 %v125
    %v429 = vunpack.c.l.b16 %v126
    %v430 = vunpack.c.l.b16 %v127
    %v431 = vunpack.c.l.b16 %v128
    %v432 = vunpack.c.l.b16 %v129
    %v433 = vunpack.c.l.b16 %v130
    %v434 = vunpack.c.l.b16 %v131
    %v435 = vunpack.c.l.b16 %v132
    %v436 = vunpack.c.l.b16 %v133
    %v437 = vunpack.c.l.b16 %v134
    %v438 = vunpack.c.l.b16 %v135
    %v439 = vunpack.c.l.b16 %v136
    %v440 = vunpack.c.l.b16 %v137
    %v441 = vunpack.c.l.b16 %v138
    %v442 = vunpack.c.l.b16 %v139
    %v443 = vunpack.c.l.b16 %v140
    %v444 = vunpack.c.l.b16 %v141
    %v445 = vunpack.c.l.b16 %v142
    %v446 = vunpack.c.l.b16 %v143
    %v447 = vunpack.c.l.b16 %v144
    %v448 = vunpack.c.l.b16 %v145
    %v449 = vunpack.c.l.b16 %v146
    %v450 = vunpack.c.l.b16 %v147
    %v451 = vunpack.c.l.b16 %v148
    %v452 = vunpack.c.l.b16 %v149
    %v453 = vunpack.c.l.b16 %v150
    %v454 = vunpack.c.l.b16 %v151
    %v455 = vunpack.c.l.b16 %v152
    %v456 = vunpack.c.l.b16 %v153
    %v457 = vunpack.c.l.b16 %v154
    %v458 = vunpack.c.l.b16 %v155
    %v459 = vunpack.c.l.b16 %v156
    %v460 = vunpack.c.l.b16 %v157
    %v461 = vunpack.c.l.b16 %v158
    %v462 = vunpack.c.l.b16 %v159
    %v463 = vunpack.c.l.b16 %v160
    %v464 = vunpack.c.l.b16 %v161
    %v465 = vunpack.c.l.b16 %v162
    %v466 = vunpack.c.l.b16 %v163
    %v467 = vunpack.c.l.b16 %v164
    %v468 = vunpack.c.l.b16 %v165
    %v469 = vunpack.c.l.b16 %v166
    %v470 = vunpack.c.l.b16 %v167
    %v471 = vunpack.c.l.b16 %v168
    %v472 = vunpack.c.l.b16 %v169
    %v473 = vunpack.c.l.b16 %v170
    %v474 = vunpack.c.l.b16 %v171
    %v475 = vunpack.c.l.b16 %v172
    %v476 = vunpack.c.l.b16 %v173
    %v477 = vunpack.c.l.b16 %v174
    %v478 = vunpack.c.l.b16 %v175
    %v479 = vunpack.c.l.b16 %v176
    %v480 = vunpack.c.l.b16 %v177
    %v481 = vunpack.c.l.b16 %v178
    %v482 = vunpack.c.l.b16 %v179
    %v483 = vpack.c.b16 %v356, %v355
    %v484 = vpack.c.b16 %v358, %v357
    %v485 = vpack.c.b16 %v360, %v359
    %v486 = vpack.c.b16 %v362, %v361
    %v487 = vpack.c.b16 %v364, %v363
    %v488 = vpack.c.b16 %v366, %v365
    %v489 = vpack.c.b16 %v368, %v367
    %v490 = vpack.c.b16 %v370, %v369
    %v491 = vpack.c.b16 %v372, %v371
    %v492 = vpack.c.b16 %v374, %v373
    %v493 = vpack.c.b16 %v376, %v375
    %v494 = vpack.c.b16 %v378, %v377
    %v495 = vpack.c.b16 %v380, %v379
    %v496 = vpack.c.b16 %v382, %v381
    %v497 = vpack.c.b16 %v384, %v383
    %v498 = vpack.c.b16 %v386, %v385
    %v499 = vpack.c.b16 %v388, %v387
    %v500 = vpack.c.b16 %v390, %v389
    %v501 = vpack.c.b16 %v392, %v391
    %v502 = vpack.c.b16 %v394, %v393
    %v503 = vpack.c.b16 %v396, %v395
    %v504 = vpack.c.b16 %v398, %v397
    %v505 = vpack.c.b16 %v400, %v399
    %v506 = vpack.c.b16 %v402, %v401
    %v507 = vpack.c.b16 %v404, %v403
    %v508 = vpack.c.b16 %v406, %v405
    %v509 = vpack.c.b16 %v408, %v407
    %v510 = vpack.c.b16 %v410, %v409
    %v511 = vpack.c.b16 %v412, %v411
    %v512 = vpack.c.b16 %v414, %v413
    %v513 = vpack.c.b16 %v416, %v415
    %v514 = vpack.c.b16 %v418, %v417
    %v515 = vpack.c.b16 %v420, %v419
    %v516 = vpack.c.b16 %v422, %v421
    %v517 = vpack.c.b16 %v424, %v423
    %v518 = vpack.c.b16 %v426, %v425
    %v519 = vpack.c.b16 %v428, %v427
    %v520 = vpack.c.b16 %v430, %v429
    %v521 = vpack.c.b16 %v432, %v431
    %v522 = vpack.c.b16 %v434, %v433
    %v523 = vpack.c.b16 %v436, %v435
    %v524 = vpack.c.b16 %v438, %v437
    %v525 = vpack.c.b16 %v440, %v439
    %v526 = vpack.c.b16 %v442, %v441
    %v527 = vpack.c.b16 %v444, %v443
    %v528 = vpack.c.b16 %v446, %v445
    %v529 = vpack.c.b16 %v448, %v447
    %v530 = vpack.c.b16 %v450, %v449
    %v531 = vpack.c.b16 %v452, %v451
    %v532 = vpack.c.b16 %v454, %v453
    %v533 = vpack.c.b16 %v456, %v455
    %v534 = vpack.c.b16 %v458, %v457
    %v535 = vpack.c.b16 %v460, %v459
    %v536 = vpack.c.b16 %v462, %v461
    %v537 = vpack.c.b16 %v464, %v463
    %v538 = vpack.c.b16 %v466, %v465
    %v539 = vpack.c.b16 %v468, %v467
    %v540 = vpack.c.b16 %v470, %v469
    %v541 = vpack.c.b16 %v472, %v471
    %v542 = vpack.c.b16 %v474, %v473
    %v543 = vpack.c.b16 %v476, %v475
    %v544 = vpack.c.b16 %v478, %v477
    %v545 = vpack.c.b16 %v480, %v479
    %v546 = vpack.c.b16 %v482, %v481
    %611 = vmatprep.subr.bf16.mxu0 0
    %612 = vmatpush1.bf16.msra.mxu0 %v483
    %613 = vmatprep.subr.bf16.mxu0 0
    %614 = vmatpush1.bf16.msra.mxu0 %v484
    %615 = vmatprep.subr.bf16.mxu0 0
    %616 = vmatpush1.bf16.msra.mxu0 %v485
    %617 = vmatprep.subr.bf16.mxu0 0
    %618 = vmatpush1.bf16.msra.mxu0 %v486
    %619 = vmatprep.subr.bf16.mxu0 0
    %620 = vmatpush1.bf16.msra.mxu0 %v487
    %621 = vmatprep.subr.bf16.mxu0 0
    %622 = vmatpush1.bf16.msra.mxu0 %v488
    %623 = vmatprep.subr.bf16.mxu0 0
    %624 = vmatpush1.bf16.msra.mxu0 %v489
    %625 = vmatprep.subr.bf16.mxu0 0
    %626 = vmatpush1.bf16.msra.mxu0 %v490
    %627 = vmatprep.subr.bf16.mxu0 0
    %628 = vmatpush1.bf16.msra.mxu0 %v491
    %629 = vmatprep.subr.bf16.mxu0 0
    %630 = vmatpush1.bf16.msra.mxu0 %v492
    %631 = vmatprep.subr.bf16.mxu0 0
    %632 = vmatpush1.bf16.msra.mxu0 %v493
    %633 = vmatprep.subr.bf16.mxu0 0
    %634 = vmatpush1.bf16.msra.mxu0 %v494
    %635 = vmatprep.subr.bf16.mxu0 0
    %636 = vmatpush1.bf16.msra.mxu0 %v495
    %637 = vmatprep.subr.bf16.mxu0 0
    %638 = vmatpush1.bf16.msra.mxu0 %v496
    %639 = vmatprep.subr.bf16.mxu0 0
    %640 = vmatpush1.bf16.msra.mxu0 %v497
    %641 = vmatprep.subr.bf16.mxu0 0
    %642 = vmatpush1.bf16.msra.mxu0 %v498
    %643 = vmatprep.mubr.bf16.mxu0 %v200
    %644 = vmatmul.mubr.bf16.gmra.mrb[0].mxu0 %v192
    %v645 = vpop.f32.mrb[0].mxu0
    %v646 = vadd.f32 0.0, %v645
    %v647 = vpop.f32.mrb[0].mxu0
    %v648 = vpop.f32.mrb[0].mxu0
    %v649 = vpop.f32.mrb[0].mxu0
    %650 = vdwg.mxu0
    %651 = vmatprep.subr.bf16.mxu0 0
    %652 = vmatpush1.bf16.msra.mxu0 %v499
    %653 = vmatprep.subr.bf16.mxu0 0
    %654 = vmatpush1.bf16.msra.mxu0 %v500
    %655 = vmatprep.subr.bf16.mxu0 0
    %656 = vmatpush1.bf16.msra.mxu0 %v501
    %657 = vmatprep.subr.bf16.mxu0 0
    %658 = vmatpush1.bf16.msra.mxu0 %v502
    %659 = vmatprep.subr.bf16.mxu0 0
    %660 = vmatpush1.bf16.msra.mxu0 %v503
    %661 = vmatprep.subr.bf16.mxu0 0
    %662 = vmatpush1.bf16.msra.mxu0 %v504
    %663 = vmatprep.subr.bf16.mxu0 0
    %664 = vmatpush1.bf16.msra.mxu0 %v505
    %665 = vmatprep.subr.bf16.mxu0 0
    %666 = vmatpush1.bf16.msra.mxu0 %v506
    %667 = vmatprep.subr.bf16.mxu0 0
    %668 = vmatpush1.bf16.msra.mxu0 %v507
    %669 = vmatprep.subr.bf16.mxu0 0
    %670 = vmatpush1.bf16.msra.mxu0 %v508
    %671 = vmatprep.subr.bf16.mxu0 0
    %672 = vmatpush1.bf16.msra.mxu0 %v509
    %673 = vmatprep.subr.bf16.mxu0 0
    %674 = vmatpush1.bf16.msra.mxu0 %v510
    %675 = vmatprep.subr.bf16.mxu0 0
    %676 = vmatpush1.bf16.msra.mxu0 %v511
    %677 = vmatprep.subr.bf16.mxu0 0
    %678 = vmatpush1.bf16.msra.mxu0 %v512
    %679 = vmatprep.subr.bf16.mxu0 0
    %680 = vmatpush1.bf16.msra.mxu0 %v513
    %681 = vmatprep.subr.bf16.mxu0 0
    %682 = vmatpush1.bf16.msra.mxu0 %v514
    %683 = vmatprep.mubr.bf16.mxu0 %v201
    %684 = vmatmul.mubr.bf16.gmra.mrb[0].mxu0 %v199
    %v685 = vpop.f32.mrb[0].mxu0
    %v686 = vadd.f32 %v646, %v685
    %v687 = vpop.f32.mrb[0].mxu0
    %v688 = vpop.f32.mrb[0].mxu0
    %v689 = vpop.f32.mrb[0].mxu0
    %690 = vdwg.mxu0
    %691 = vmatprep.subr.bf16.mxu0 0
    %692 = vmatpush1.bf16.msra.mxu0 %v515
    %693 = vmatprep.subr.bf16.mxu0 0
    %694 = vmatpush1.bf16.msra.mxu0 %v516
    %695 = vmatprep.subr.bf16.mxu0 0
    %696 = vmatpush1.bf16.msra.mxu0 %v517
    %697 = vmatprep.subr.bf16.mxu0 0
    %698 = vmatpush1.bf16.msra.mxu0 %v518
    %699 = vmatprep.subr.bf16.mxu0 0
    %700 = vmatpush1.bf16.msra.mxu0 %v519
    %701 = vmatprep.subr.bf16.mxu0 0
    %702 = vmatpush1.bf16.msra.mxu0 %v520
    %703 = vmatprep.subr.bf16.mxu0 0
    %704 = vmatpush1.bf16.msra.mxu0 %v521
    %705 = vmatprep.subr.bf16.mxu0 0
    %706 = vmatpush1.bf16.msra.mxu0 %v522
    %707 = vmatprep.subr.bf16.mxu0 0
    %708 = vmatpush1.bf16.msra.mxu0 %v523
    %709 = vmatprep.subr.bf16.mxu0 0
    %710 = vmatpush1.bf16.msra.mxu0 %v524
    %711 = vmatprep.subr.bf16.mxu0 0
    %712 = vmatpush1.bf16.msra.mxu0 %v525
    %713 = vmatprep.subr.bf16.mxu0 0
    %714 = vmatpush1.bf16.msra.mxu0 %v526
    %715 = vmatprep.subr.bf16.mxu0 0
    %716 = vmatpush1.bf16.msra.mxu0 %v527
    %717 = vmatprep.subr.bf16.mxu0 0
    %718 = vmatpush1.bf16.msra.mxu0 %v528
    %719 = vmatprep.subr.bf16.mxu0 0
    %720 = vmatpush1.bf16.msra.mxu0 %v529
    %721 = vmatprep.subr.bf16.mxu0 0
    %722 = vmatpush1.bf16.msra.mxu0 %v530
    %723 = vmatprep.mubr.bf16.mxu0 %v217
    %724 = vmatmul.mubr.bf16.gmra.mrb[0].mxu0 %v209
    %v725 = vpop.f32.mrb[0].mxu0
    %v726 = vadd.f32 %v686, %v725
    %v727 = vpop.f32.mrb[0].mxu0
    %v728 = vpop.f32.mrb[0].mxu0
    %v729 = vpop.f32.mrb[0].mxu0
    %730 = vdwg.mxu0
    %731 = vmatprep.subr.bf16.mxu0 0
    %732 = vmatpush1.bf16.msra.mxu0 %v531
    %733 = vmatprep.subr.bf16.mxu0 0
    %734 = vmatpush1.bf16.msra.mxu0 %v532
    %735 = vmatprep.subr.bf16.mxu0 0
    %736 = vmatpush1.bf16.msra.mxu0 %v533
    %737 = vmatprep.subr.bf16.mxu0 0
    %738 = vmatpush1.bf16.msra.mxu0 %v534
    %739 = vmatprep.subr.bf16.mxu0 0
    %740 = vmatpush1.bf16.msra.mxu0 %v535
    %741 = vmatprep.subr.bf16.mxu0 0
    %742 = vmatpush1.bf16.msra.mxu0 %v536
    %743 = vmatprep.subr.bf16.mxu0 0
    %744 = vmatpush1.bf16.msra.mxu0 %v537
    %745 = vmatprep.subr.bf16.mxu0 0
    %746 = vmatpush1.bf16.msra.mxu0 %v538
    %747 = vmatprep.subr.bf16.mxu0 0
    %748 = vmatpush1.bf16.msra.mxu0 %v539
    %749 = vmatprep.subr.bf16.mxu0 0
    %750 = vmatpush1.bf16.msra.mxu0 %v540
    %751 = vmatprep.subr.bf16.mxu0 0
    %752 = vmatpush1.bf16.msra.mxu0 %v541
    %753 = vmatprep.subr.bf16.mxu0 0
    %754 = vmatpush1.bf16.msra.mxu0 %v542
    %755 = vmatprep.subr.bf16.mxu0 0
    %756 = vmatpush1.bf16.msra.mxu0 %v543
    %757 = vmatprep.subr.bf16.mxu0 0
    %758 = vmatpush1.bf16.msra.mxu0 %v544
    %759 = vmatprep.subr.bf16.mxu0 0
    %760 = vmatpush1.bf16.msra.mxu0 %v545
    %761 = vmatprep.subr.bf16.mxu0 0
    %762 = vmatpush1.bf16.msra.mxu0 %v546
    %763 = vmatprep.mubr.bf16.mxu0 %v218
    %764 = vmatmul.mubr.bf16.gmra.mrb[0].mxu0 %v216
    %v765 = vpop.f32.mrb[0].mxu0
    %v766 = vadd.f32 %v726, %v765
    %v767 = vpop.f32.mrb[0].mxu0
    %v768 = vpop.f32.mrb[0].mxu0
    %v769 = vpop.f32.mrb[0].mxu0
    %770 = vdwg.mxu0
    %v771 = vadd.f32 %v180, %v766
    %772 = vst [vmem:[#allocation7] sm:$0xf] %v771
    // Predicated region
    $region26: #{tpu_custom_call.1} parent=1 // pred_check
      %p773 = pneg %p42
    $region27: #{tpu_custom_call.1} parent=1 // pred_check_branch
      %775 = sbr.rel (%p773) target = $region29
    $region28: #{tpu_custom_call.1} parent=1 // pred_region
      %v776 = vld [vmem:[#allocation7] sm:$0xf]
      %v777 = vld [vmem:[%s2] sm:$0x1]
      %v779 = vlaneseq
      %v780 = vshrl.u32 %v779, 7
      %v781 = vsub.s32 0, %v780
      %v782 = vrot.slane %v777, %v781
      %v784 = vadd.f32 %v776, %v782
      %785 = vst [vmem:[#allocation7] sm:$0xf] %v784
    $region29: #{tpu_custom_call.1} parent=1 // pred_fallthru
      _
    // Predicated region
    $region30: #{tpu_custom_call.1} parent=1 // pred_check
      _
    $region31: #{tpu_custom_call.1} parent=1 // pred_check_branch
      %787 = sbr.rel (0) target = $region33
    $region32: #{tpu_custom_call.1} parent=1 // pred_region
      %s789 = ssub.s32 64, 64
      %790 = vsyncadd [#allocation4], %s789
      %s792 = sshll.u32 [#allocation7], 4
      %s793 = int_to_ptr.vmem [resolvable:$true] %s792
      %795 = dma.vmem_to_hbm [thread:$0]  %s793, 64, %s3, [#allocation4]
    $region33: #{tpu_custom_call.1} parent=1 // pred_fallthru
      _
    // Predicated region
    $region34: #{tpu_custom_call.1} parent=1 // pred_check
      _
    $region35: #{tpu_custom_call.1} parent=1 // pred_check_branch
      %797 = sbr.rel (0) target = $region37
    $region36: #{tpu_custom_call.1} parent=1 // pred_region
      %798 = dma.done [#allocation4], 64
    $region37: #{tpu_custom_call.1} parent=1 // pred_fallthru
      _
    %799 = vsyncpa [#allocation3], 1
    %800 = vsyncpa [#allocation6], 1
    %801 = vsyncpa [#allocation4], 1

</llo_original>
